<compile_context>
chip_gen: v6e
topology: v6e:2x2x1
jax: 0.10.0
libtpu: 0.0.40
codegen_flags: <defaults>
</compile_context>

<pallas_src>
import jax
import jax.numpy as jnp
from jax.experimental import pallas as pl
from jax.experimental.pallas import tpu as pltpu

PADDING_IDX = 1  # ESM alphabet padding_idx


def _round_up(x, m):
    return (x + m - 1) // m * m


def _vmem_limit_bytes():
    """Generation-aware VMEM budget (v5e/v6e: 128 MiB physical, v7x: 64 MiB)."""
    cap = 128 * 1024 * 1024
    try:
        cap = int(getattr(pltpu.get_tpu_info(), "vmem_capacity_bytes", cap))
    except Exception:
        pass
    # ~3/4 of physical, capped at 100 MiB; leaves headroom for compiler scratch.
    return max(32 * 1024 * 1024, min(int(cap * 3 // 4), 100 * 1024 * 1024))


def esm_head_kernel(lens_ref, reps_ref, w_ref, b_ref, out_ref, acc_ref):
    # lens_ref: VMEM (TB, 1)      int32    sequence lengths for this batch tile
    # reps_ref: VMEM (TB, TT, D)  bf16/f32 tile of representations
    # w_ref:    VMEM (D, Cpad)    f32      projection (lane-padded columns)
    # b_ref:    VMEM (1, Cpad)    f32      "ones pad" row of W (bias)
    # out_ref:  VMEM (TB, Cpad)   f32
    # acc_ref:  VMEM (TB, D)      f32      running masked sum over T
    ti = pl.program_id(1)
    nt = pl.num_programs(1)
    tb, tt, _ = reps_ref.shape

    @pl.when(ti == 0)
    def _init():
        acc_ref[...] = jnp.zeros_like(acc_ref)

    # Validity mask built directly in (TB, TT, 1) layout (positions on sublanes),
    # so the broadcast against (TB, TT, D) reps is a free lane splat.
    pos = jax.lax.broadcasted_iota(jnp.int32, (tb, tt, 1), 1) + ti * tt
    lens3 = lens_ref[...].reshape(tb, 1, 1)
    valid = jnp.logical_and(pos >= 1, pos < lens3 - 1)      # token t in [1, len-2]

    # where-select (not multiply): NaN/Inf-safe against undefined ragged-edge bytes.
    contrib = jnp.where(valid, reps_ref[...].astype(jnp.float32), 0.0)
    acc_ref[...] += jnp.sum(contrib, axis=1)                # (TB, D), f32 accumulate
    # TODO(synk): if the Mosaic bundle dump ever shows this masked sum materializing
    # a (TB, TT, D) VMEM temporary, switch to an MXU einsum('btd,bt->bd') reduce.

    @pl.when(ti == nt - 1)
    def _finalize():
        # counts are analytic: number of tokens in [1, len-2] is max(len-2, 0);
        # clamp at 1 so len<=2 rows yield pooled=0 (bias-only output) instead of NaN.
        counts = jnp.maximum(lens_ref[...].astype(jnp.float32) - 2.0, 1.0)  # (TB, 1)
        pooled = acc_ref[...] / counts                                       # (TB, D)
        out = jnp.dot(pooled, w_ref[...], preferred_element_type=jnp.float32)
        out_ref[...] = (out + b_ref[...]).astype(out_ref.dtype)


def esm_forward(x_ids, reps, w, padding_idx=PADDING_IDX, tb=None, tt=None):
    """pooled = masked mean of reps[:, 1:len-1]; out = [pooled, 1] @ W.

    Note: sequences with len <= 2 produce the bias row (pooled = 0) where the
    PyTorch reference would produce NaN from an empty-slice mean (documented
    intentional divergence).
    """
    B, T = x_ids.shape
    D = reps.shape[-1]
    assert reps.shape[:2] == (B, T), "reps must be (B, T, D)"
    assert w.shape[0] == D + 1, f"W must have D+1={D + 1} rows, got {w.shape[0]}"
    C1 = w.shape[1]                       # = ClassEmbeddingsize + 1
    cpad = _round_up(C1, 128)             # lane-dense output / W columns

    itemsize = jnp.dtype(reps.dtype).itemsize
    vmem_limit = _vmem_limit_bytes()

    # --- tile selection -------------------------------------------------------
    if tb is None:
        if B >= 128:
            tb = 64                                    # dense finalize matmul / store
        elif B >= 16:
            tb = max(8, ((B // 2) // 8) * 8)           # >= 2 B blocks for v7x megacore
        else:
            tb = 8
    tb = max(8, (tb // 8) * 8)
    bp = _round_up(B, tb)

    if tt is None:
        # Double-buffered reps tiles within ~half the VMEM budget.
        per_row = 2 * tb * D * itemsize
        tt = max(8, int((vmem_limit // 2) // max(per_row, 1)))
    tt = min(tt, T)
    if tt < T:
        tt = max(8, (tt // 8) * 8)

    grid = (bp // tb, pl.cdiv(T, tt))

    # Sequence lengths (tiny) — the kernel never sees the token ids.
    lens = jnp.sum((x_ids != padding_idx).astype(jnp.int32), axis=1)
    lens = jnp.pad(lens, (0, bp - B)).reshape(bp, 1).astype(jnp.int32)

    # Pre-split & lane-pad W: main matrix (D, Cpad) and the "ones pad" bias row.
    w = w.astype(jnp.float32)
    w_main = jnp.zeros((D, cpad), jnp.float32).at[:, :C1].set(w[:D])
    w_bias = jnp.zeros((1, cpad), jnp.float32).at[:, :C1].set(w[D:D + 1])

    # reps stream as-is (bf16 recommended) — no wrapper-side pad/copy of the big
    # tensor; ragged B/T edge blocks are zeroed by the in-kernel where-mask.
    def _const_spec(shape):  # grid-invariant blocks: single-buffered to save VMEM
        return pl.BlockSpec(shape, lambda b, t: (0, 0), pipeline_mode=pl.Buffered(1))

    grid_spec = pltpu.PrefetchScalarGridSpec(
        num_scalar_prefetch=0,
        grid=grid,
        in_specs=[
            pl.BlockSpec((tb, 1), lambda b, t: (b, 0)),          # lens
            pl.BlockSpec((tb, tt, D), lambda b, t: (b, t, 0)),   # reps (pipelined)
            _const_spec((D, cpad)),                              # W main
            _const_spec((1, cpad)),                              # bias row
        ],
        out_specs=pl.BlockSpec((tb, cpad), lambda b, t: (b, 0)),
        scratch_shapes=[pltpu.VMEM((tb, D), jnp.float32)],       # masked-sum acc
    )

    cost = pl.CostEstimate(
        flops=2 * B * T * D + 2 * bp * D * cpad,
        transcendentals=0,
        bytes_accessed=(B * T * D * itemsize + (D + 1) * cpad * 4
                        + bp * cpad * 4 + bp * 4),
    )

    out_pad = pl.pallas_call(
        esm_head_kernel,
        grid_spec=grid_spec,
        out_shape=jax.ShapeDtypeStruct((bp, cpad), jnp.float32),
        compiler_params=pltpu.CompilerParams(
            dimension_semantics=("parallel", "arbitrary"),  # B across TCs, T sequential
            vmem_limit_bytes=vmem_limit,
        ),
        cost_estimate=cost,
    )(lens, reps, w_main, w_bias)

    return out_pad[:B, :C1]


def esm_forward_ref(x_ids, reps, w, padding_idx=PADDING_IDX):
    # Plain-JAX reference mirroring the PyTorch loop (eager, concrete lens);
    # math in f32 regardless of the streaming dtype of reps.
    reps = reps.astype(jnp.float32)
    w = w.astype(jnp.float32)
    lens = jnp.sum(x_ids != padding_idx, axis=1)
    rows = []
    for i in range(x_ids.shape[0]):
        li = int(lens[i])
        rows.append(jnp.mean(reps[i, 1:li - 1], axis=0))
    emb = jnp.stack(rows)                                          # (B, D)
    emb = jnp.concatenate([emb, jnp.ones((emb.shape[0], 1), emb.dtype)], axis=1)
    return jnp.dot(emb, w, precision=jax.lax.Precision.HIGHEST)


if __name__ == "__main__":
    key = jax.random.PRNGKey(0)
    B, T, D, C = 16, 64, 32, 15          # C = ClassEmbeddingsize
    VOCAB = 33                            # ESM alphabet size
    k_w, k_emb, k_tok = jax.random.split(key, 3)

    # Deterministic parameter init: torch.rand(D+1, C+1) * 0.05 analogue.
    W = jax.random.uniform(k_w, (D + 1, C + 1), jnp.float32) * 0.05

    # TODO(synk): the pretrained ESM transformer stack (load_esm_model) is not
    # replicated; its per-token last-hidden-state output is stood in by a
    # deterministic embedding-table lookup producing the same (B, T, D) tensor.
    emb_table = jax.random.normal(k_emb, (VOCAB, D), jnp.float32)

    # Token ids: 0 = BOS/CLS, 2 = EOS, 1 = padding, 3.. = residues; variable lengths.
    lengths = 5 + (7 * jnp.arange(B)) % (T - 5)                    # 5 .. T-1
    pos = jnp.arange(T)[None, :]
    content = jax.random.randint(k_tok, (B, T), 3, VOCAB)
    x_ids = jnp.where(pos == 0, 0,
            jnp.where(pos == lengths[:, None] - 1, 2,
            jnp.where(pos < lengths[:, None] - 1, content, 1))).astype(jnp.int32)

    # Activations streamed in bf16 (half the HBM traffic of f32).
    reps = emb_table[x_ids].astype(jnp.bfloat16)                   # (B, T, D)

    # tb=8, tt=24 -> grid (2, 3) with a ragged T tail (64 = 2*24 + 16): exercises the
    # parallel batch axis, the T reduction, and the mask-handled edge block (no pad).
    out = esm_forward(x_ids, reps, W, tb=8, tt=24)
    out = jax.block_until_ready(out)

    ref = esm_forward_ref(x_ids, reps, W)
    assert out.shape == (B, C + 1)
    assert jnp.allclose(out, ref, atol=1e-4, rtol=1e-3), "mismatch vs reference"
    print("KERNEL_OK")
</pallas_src>

<mosaic_0001>
module attributes {stable_mosaic.version = 11 : i64} {
  func.func @esm_head_kernel(%arg0: i32, %arg1: i32, %arg2: memref<8x1xi32, #tpu.memory_space<vmem>>, %arg3: memref<8x24x32xbf16, #tpu.memory_space<vmem>>, %arg4: memref<32x128xf32, #tpu.memory_space<vmem>>, %arg5: memref<1x128xf32, #tpu.memory_space<vmem>>, %arg6: memref<8x128xf32, #tpu.memory_space<vmem>>, %arg7: memref<8x32xf32, #tpu.memory_space<vmem>>) attributes {dimension_semantics = [#tpu.dimension_semantics<parallel>, #tpu.dimension_semantics<arbitrary>], iteration_bounds = array<i64: 2, 3>, scalar_prefetch = 0 : i64, scratch_operands = 1 : i64, tpu.core_type = #tpu.core_type<tc>, window_params = [{transform_indices = @transform_0, window_bounds = array<i64: 8, 1>}, {transform_indices = @transform_1, window_bounds = array<i64: 8, 24, 32>}, {pipeline_mode = #tpu.pipeline_mode<synchronous>, transform_indices = @transform_2, window_bounds = array<i64: 32, 128>}, {pipeline_mode = #tpu.pipeline_mode<synchronous>, transform_indices = @transform_3, window_bounds = array<i64: 1, 128>}, {transform_indices = @transform_4, window_bounds = array<i64: 8, 128>}]} {
    %c0_i32 = arith.constant 0 : i32
    %0 = arith.cmpi eq, %arg1, %c0_i32 : i32
    %1 = arith.extui %0 : i1 to i32
    %c0_i32_0 = arith.constant 0 : i32
    %2 = arith.cmpi ne, %1, %c0_i32_0 : i32
    scf.if %2 {
      %cst_12 = arith.constant 0.000000e+00 : f32
      %29 = vector.broadcast %cst_12 : f32 to vector<8x32xf32>
      %c0_13 = arith.constant 0 : index
      %c0_14 = arith.constant 0 : index
      %30 = vector.load %arg7[%c0_13, %c0_14] : memref<8x32xf32, #tpu.memory_space<vmem>>, vector<8x32xf32>
      tpu.vector_store %arg7[%c0_13, %c0_14], %29 {strides = array<i32>} : memref<8x32xf32, #tpu.memory_space<vmem>>, vector<8x32xf32>,
    } else {
    }
    %3 = tpu.iota {dimensions = array<i32: 1>} : vector<8x24x1xi32>
    %c24_i32 = arith.constant 24 : i32
    %4 = arith.muli %arg1, %c24_i32 : i32
    %5 = vector.broadcast %4 : i32 to vector<8x24x1xi32>
    %6 = arith.addi %3, %5 : vector<8x24x1xi32>
    %c0 = arith.constant 0 : index
    %c0_1 = arith.constant 0 : index
    %7 = vector.load %arg2[%c0, %c0_1] : memref<8x1xi32, #tpu.memory_space<vmem>>, vector<8x1xi32>
    %8 = vector.shape_cast %7 : vector<8x1xi32> to vector<8x1x1xi32>
    %c1_i32 = arith.constant 1 : i32
    %9 = vector.broadcast %c1_i32 : i32 to vector<8x24x1xi32>
    %10 = arith.cmpi sge, %6, %9 : vector<8x24x1xi32>
    %c1_i32_2 = arith.constant 1 : i32
    %11 = vector.broadcast %c1_i32_2 : i32 to vector<8x1x1xi32>
    %12 = arith.subi %8, %11 : vector<8x1x1xi32>
    %13 = vector.broadcast %12 : vector<8x1x1xi32> to vector<8x24x1xi32>
    %14 = arith.cmpi slt, %6, %13 : vector<8x24x1xi32>
    %15 = arith.andi %10, %14 : vector<8x24x1xi1>
    %c0_3 = arith.constant 0 : index
    %c0_4 = arith.constant 0 : index
    %c0_5 = arith.constant 0 : index
    %16 = vector.load %arg3[%c0_3, %c0_4, %c0_5] : memref<8x24x32xbf16, #tpu.memory_space<vmem>>, vector<8x24x32xbf16>
    %17 = arith.extf %16 : vector<8x24x32xbf16> to vector<8x24x32xf32>
    %cst = arith.constant 0.000000e+00 : f32
    %18 = vector.shape_cast %15 : vector<8x24x1xi1> to vector<8x24x1xi1>
    %19 = vector.broadcast %18 : vector<8x24x1xi1> to vector<8x24x32xi1>
    %20 = vector.broadcast %cst : f32 to vector<8x24x32xf32>
    %21 = arith.select %19, %17, %20 : vector<8x24x32xi1>, vector<8x24x32xf32>
    %c0_6 = arith.constant 0 : index
    %c0_7 = arith.constant 0 : index
    %22 = vector.load %arg7[%c0_6, %c0_7] : memref<8x32xf32, #tpu.memory_space<vmem>>, vector<8x32xf32>
    %cst_8 = arith.constant dense<0.000000e+00> : vector<8x32xf32>
    %23 = vector.multi_reduction <add>, %21, %cst_8 [1] : vector<8x24x32xf32> to vector<8x32xf32>
    %24 = arith.addf %22, %23 : vector<8x32xf32>
    %c0_9 = arith.constant 0 : index
    %c0_10 = arith.constant 0 : index
    %25 = vector.load %arg7[%c0_9, %c0_10] : memref<8x32xf32, #tpu.memory_space<vmem>>, vector<8x32xf32>
    tpu.vector_store %arg7[%c0_9, %c0_10], %24 {strides = array<i32>} : memref<8x32xf32, #tpu.memory_space<vmem>>, vector<8x32xf32>,
    %c2_i32 = arith.constant 2 : i32
    %26 = arith.cmpi eq, %arg1, %c2_i32 : i32
    %27 = arith.extui %26 : i1 to i32
    %c0_i32_11 = arith.constant 0 : i32
    %28 = arith.cmpi ne, %27, %c0_i32_11 : i32
    scf.if %28 {
      %c0_12 = arith.constant 0 : index
      %c0_13 = arith.constant 0 : index
      %29 = vector.load %arg2[%c0_12, %c0_13] : memref<8x1xi32, #tpu.memory_space<vmem>>, vector<8x1xi32>
      %30 = arith.sitofp %29 : vector<8x1xi32> to vector<8x1xf32>
      %cst_14 = arith.constant 2.000000e+00 : f32
      %31 = vector.broadcast %cst_14 : f32 to vector<8x1xf32>
      %32 = arith.subf %30, %31 : vector<8x1xf32>
      %cst_15 = arith.constant 1.000000e+00 : f32
      %33 = vector.broadcast %cst_15 : f32 to vector<8x1xf32>
      %34 = arith.maximumf %32, %33 : vector<8x1xf32>
      %c0_16 = arith.constant 0 : index
      %c0_17 = arith.constant 0 : index
      %35 = vector.load %arg7[%c0_16, %c0_17] : memref<8x32xf32, #tpu.memory_space<vmem>>, vector<8x32xf32>
      %36 = vector.broadcast %34 : vector<8x1xf32> to vector<8x32xf32>
      %37 = arith.divf %35, %36 : vector<8x32xf32>
      %c0_18 = arith.constant 0 : index
      %c0_19 = arith.constant 0 : index
      %38 = vector.load %arg4[%c0_18, %c0_19] : memref<32x128xf32, #tpu.memory_space<vmem>>, vector<32x128xf32>
      %cst_20 = arith.constant dense<0.000000e+00> : vector<8x128xf32>
      %39 = tpu.matmul %37, %38, %cst_20 {dimension_numbers = #tpu.dot_dimension_numbers<[1], [0], [0], [1], [0, 0, 1, 1], [], []>} : vector<8x32xf32>, vector<32x128xf32>, vector<8x128xf32> -> vector<8x128xf32>
      %c0_21 = arith.constant 0 : index
      %c0_22 = arith.constant 0 : index
      %40 = vector.load %arg5[%c0_21, %c0_22] : memref<1x128xf32, #tpu.memory_space<vmem>>, vector<1x128xf32>
      %41 = vector.broadcast %40 : vector<1x128xf32> to vector<8x128xf32>
      %42 = arith.addf %39, %41 : vector<8x128xf32>
      %c0_23 = arith.constant 0 : index
      %c0_24 = arith.constant 0 : index
      %43 = vector.load %arg6[%c0_23, %c0_24] : memref<8x128xf32, #tpu.memory_space<vmem>>, vector<8x128xf32>
      tpu.vector_store %arg6[%c0_23, %c0_24], %42 {strides = array<i32>} : memref<8x128xf32, #tpu.memory_space<vmem>>, vector<8x128xf32>,
    } else {
    }
    return
  }
  func.func @transform_0(%arg0: i32, %arg1: i32) -> (i32, i32) {
    %c0_i32 = arith.constant 0 : i32
    %c0_i32_0 = arith.constant 0 : i32
    return %arg0, %c0_i32 : i32, i32
  }
  func.func @transform_1(%arg0: i32, %arg1: i32) -> (i32, i32, i32) {
    %c0_i32 = arith.constant 0 : i32
    %c0_i32_0 = arith.constant 0 : i32
    return %arg0, %arg1, %c0_i32 : i32, i32, i32
  }
  func.func @transform_2(%arg0: i32, %arg1: i32) -> (i32, i32) {
    %c0_i32 = arith.constant 0 : i32
    %c0_i32_0 = arith.constant 0 : i32
    %c0_i32_1 = arith.constant 0 : i32
    return %c0_i32, %c0_i32_0 : i32, i32
  }
  func.func @transform_3(%arg0: i32, %arg1: i32) -> (i32, i32) {
    %c0_i32 = arith.constant 0 : i32
    %c0_i32_0 = arith.constant 0 : i32
    %c0_i32_1 = arith.constant 0 : i32
    return %c0_i32, %c0_i32_0 : i32, i32
  }
  func.func @transform_4(%arg0: i32, %arg1: i32) -> (i32, i32) {
    %c0_i32 = arith.constant 0 : i32
    %c0_i32_0 = arith.constant 0 : i32
    return %arg0, %c0_i32 : i32, i32
  }
}

</mosaic_0001>

<llo_original>
// kernel: tpu_custom_call.1
$region0: #{tpu_custom_call.1}
  #allocation0 [shape = 'u32[]', space=smem, size = 0x4, offset = 0x4, fixed_abs, tag = 'smem constant byte address 0x4 - core index']
  #allocation1 [shape = 'u32[144,128]{1,0:T(1,128)}', space=vmem, size = 0x12000, scoped, tag = 'internal scratch']
  #allocation2 [shape = 'f32[8,32]{1,0:T(8,128)}', space=vmem, size = 0x1000, scoped, tag = 'scratch operand']
  %s0 = inlined_call_operand.vmem [shape: s32[16,1], index: 0, kind: input, shape index: {}]
  %s1 = inlined_call_operand.vmem [shape: bf16[16,64,32], index: 1, kind: input, shape index: {}]
  %s2 = inlined_call_operand.vmem [shape: f32[32,128], index: 2, kind: input, shape index: {}]
  %s3 = inlined_call_operand.vmem [shape: f32[1,128], index: 3, kind: input, shape index: {}]
  %s4 = inlined_call_operand.hbm [shape: f32[16,128], index: 4, kind: output, shape index: {}]
  %s5 = sld [smem:[#allocation0]]
  $region119: #{tpu_custom_call.1} parent=0
    _
  %s7 = ssub.s32 1, %s5
  %s8 = scalar_select 0, %s7, %s5
  $region1: #{tpu_custom_call.1} parent=0
    #allocation3 [shape = 'u8[98304]{0}', space=vmem, size = 0x18000, scoped, tag = 'input window, operand 1']
    #allocation4 [shape = 'u8[8192]{0}', space=vmem, size = 0x2000, scoped, tag = 'output window, operand 0']
    #allocation5 [shape = 's32[2]{0}', space=sflag, size = 0x8, scoped, tag = 'scoped memory for tpu_custom_call.1']
    %9 = vsyncpa [#allocation5], 0
    %s10 = scalar_lea.sflag [#allocation5], 1
    %11 = vsyncpa %s10, 0
    loop: start=0, step=1, limit=8
    $region2: #{tpu_custom_call.1} parent=1 // loop_pre_header
      _
    $region3: #{tpu_custom_call.1} parent=1 // loop_header
      %s13 = sphi 0, %s17
      %p14 = scmp.ge.s32.totalorder %s13, 8
      %s20 = sphi 0, %s32
      %s21 = sphi 0, %s28
      %s22 = sphi 0, %s20
      %s23 = sphi 0, %s21
      %s24 = sphi 0, %s22
      %s25 = sphi 0, %s23
      %s35 = sphi 0, %s37
      %s38 = sphi 0, %s35
      %s39 = sphi 0, %s38
      %s55 = sphi 0, %s39
      %s63 = sphi 0, %s65
      %s66 = sphi 0, %s63
      %s67 = sphi 0, %s66
      %s83 = sphi 0, %s67
      %s87 = sphi 0, %s87
      %s89 = sphi 0, %s87
      %s90 = sphi 0, %s89
      %s104 = sphi 0, %s90
      %s108 = sphi 0, %s108
      %s110 = sphi 0, %s108
      %s111 = sphi 0, %s110
      %s125 = sphi 0, %s111
      %s131 = sphi 0, %s133
      %s134 = sphi 0, %s131
      %s135 = sphi 0, %s134
      %s151 = sphi 0, %s135
    $region4: #{tpu_custom_call.1} parent=1 // loop_header_branch
      %16 = sbr.rel (%p14) target = $region8
    $region5: #{tpu_custom_call.1} parent=1 // loop_body
      %s18 = ssub.s32 %s13, 1
      %s19 = ssub.s32 %s13, 2
      %s26 = sadd.s32 1, %s21
      %p27 = scmp.ge.s32.totalorder %s26, 3
      %s28 = scalar_select %p27, 0, %s26
      %s29 = sadd.s32 1, %s20
      %s30 = scalar_select %p27, %s29, %s20
      %p31 = scmp.ge.s32.totalorder %s30, 2
      %s32 = scalar_select %p31, 0, %s30
      %s33 = ssub.s32 %s20, %s32
      %p34 = scmp.eq.s32.totalorder %s33, 0
      %s36 = sadd.s32 %s35, 1
      %s37 = scalar_select %p34, %s35, %s36
      %p40 = pneg %p34
      %p41 = scmp.eq.s32.totalorder %s13, 5
      %p42 = por %p40, %p41
      %p43 = scmp.ne.s32.totalorder %s35, %s38
      %p44 = scmp.eq.s32.totalorder %s13, 0
      %p45 = por %p43, %p44
      %p46 = scmp.ne.s32.totalorder %s35, %s38
      %p47 = scmp.eq.s32.totalorder %s18, 5
      %p48 = por %p46, %p47
      %p49 = scmp.ne.s32.totalorder %s38, %s39
      %p50 = scmp.eq.s32.totalorder %s18, 0
      %p51 = por %p49, %p50
      %p52 = scmp.ne.s32.totalorder %s38, %s39
      %p53 = scmp.eq.s32.totalorder %s19, 5
      %p54 = por %p52, %p53
      %p56 = scmp.ne.s32.totalorder %s39, %s55
      %p57 = scmp.eq.s32.totalorder %s19, 0
      %p58 = por %p56, %p57
      %s59 = ssub.s32 %s20, %s32
      %s60 = ssub.s32 %s21, %s28
      %s61 = sor.u32 %s59, %s60
      %p62 = scmp.eq.s32.totalorder %s61, 0
      %s64 = sadd.s32 %s63, 1
      %s65 = scalar_select %p62, %s63, %s64
      %p68 = pneg %p62
      %p69 = scmp.eq.s32.totalorder %s13, 5
      %p70 = por %p68, %p69
      %p71 = scmp.ne.s32.totalorder %s63, %s66
      %p72 = scmp.eq.s32.totalorder %s13, 0
      %p73 = por %p71, %p72
      %p74 = scmp.ne.s32.totalorder %s63, %s66
      %p75 = scmp.eq.s32.totalorder %s18, 5
      %p76 = por %p74, %p75
      %p77 = scmp.ne.s32.totalorder %s66, %s67
      %p78 = scmp.eq.s32.totalorder %s18, 0
      %p79 = por %p77, %p78
      %p80 = scmp.ne.s32.totalorder %s66, %s67
      %p81 = scmp.eq.s32.totalorder %s19, 5
      %p82 = por %p80, %p81
      %p84 = scmp.ne.s32.totalorder %s67, %s83
      %p85 = scmp.eq.s32.totalorder %s19, 0
      %p86 = por %p84, %p85
      %s88 = sadd.s32 %s87, 1
      %p91 = scmp.eq.s32.totalorder %s13, 5
      %p92 = scmp.ne.s32.totalorder %s87, %s89
      %p93 = scmp.eq.s32.totalorder %s13, 0
      %p94 = por %p92, %p93
      %p95 = scmp.ne.s32.totalorder %s87, %s89
      %p96 = scmp.eq.s32.totalorder %s18, 5
      %p97 = por %p95, %p96
      %p98 = scmp.ne.s32.totalorder %s89, %s90
      %p99 = scmp.eq.s32.totalorder %s18, 0
      %p100 = por %p98, %p99
      %p101 = scmp.ne.s32.totalorder %s89, %s90
      %p102 = scmp.eq.s32.totalorder %s19, 5
      %p103 = por %p101, %p102
      %p105 = scmp.ne.s32.totalorder %s90, %s104
      %p106 = scmp.eq.s32.totalorder %s19, 0
      %p107 = por %p105, %p106
      %s109 = sadd.s32 %s108, 1
      %p112 = scmp.eq.s32.totalorder %s13, 5
      %p113 = scmp.ne.s32.totalorder %s108, %s110
      %p114 = scmp.eq.s32.totalorder %s13, 0
      %p115 = por %p113, %p114
      %p116 = scmp.ne.s32.totalorder %s108, %s110
      %p117 = scmp.eq.s32.totalorder %s18, 5
      %p118 = por %p116, %p117
      %p119 = scmp.ne.s32.totalorder %s110, %s111
      %p120 = scmp.eq.s32.totalorder %s18, 0
      %p121 = por %p119, %p120
      %p122 = scmp.ne.s32.totalorder %s110, %s111
      %p123 = scmp.eq.s32.totalorder %s19, 5
      %p124 = por %p122, %p123
      %p126 = scmp.ne.s32.totalorder %s111, %s125
      %p127 = scmp.eq.s32.totalorder %s19, 0
      %p128 = por %p126, %p127
      %s129 = ssub.s32 %s20, %s32
      %p130 = scmp.eq.s32.totalorder %s129, 0
      %s132 = sadd.s32 %s131, 1
      %s133 = scalar_select %p130, %s131, %s132
      %p136 = pneg %p130
      %p137 = scmp.eq.s32.totalorder %s13, 5
      %p138 = por %p136, %p137
      %p139 = scmp.ne.s32.totalorder %s131, %s134
      %p140 = scmp.eq.s32.totalorder %s13, 0
      %p141 = por %p139, %p140
      %p142 = scmp.ne.s32.totalorder %s131, %s134
      %p143 = scmp.eq.s32.totalorder %s18, 5
      %p144 = por %p142, %p143
      %p145 = scmp.ne.s32.totalorder %s134, %s135
      %p146 = scmp.eq.s32.totalorder %s18, 0
      %p147 = por %p145, %p146
      %p148 = scmp.ne.s32.totalorder %s134, %s135
      %p149 = scmp.eq.s32.totalorder %s19, 5
      %p150 = por %p148, %p149
      %p152 = scmp.ne.s32.totalorder %s135, %s151
      %p153 = scmp.eq.s32.totalorder %s19, 0
      %p154 = por %p152, %p153
      %p155 = scmp.le.s32.totalorder 1, %s13
      %p156 = scmp.lt.s32.totalorder %s13, 7
      %p157 = pnand %p155, %p156
      %p158 = pneg %p157
      // Predicated region
      $region9: #{tpu_custom_call.1} parent=5 // pred_check
        _
      $region10: #{tpu_custom_call.1} parent=5 // pred_check_branch
        %160 = sbr.rel (%p157) target = $region12
      $region11: #{tpu_custom_call.1} parent=5 // pred_region
        %s161 = ssub.s32 %s13, 1
        // Predicated region
        $region13: #{tpu_custom_call.1} parent=11 // pred_check
          %p162 = pneg %p100
        $region14: #{tpu_custom_call.1} parent=11 // pred_check_branch
          %164 = sbr.rel (%p162) target = $region16
        $region15: #{tpu_custom_call.1} parent=11 // pred_region
          _
        $region16: #{tpu_custom_call.1} parent=11 // pred_fallthru
          _
        // Predicated region
        $region17: #{tpu_custom_call.1} parent=11 // pred_check
          %p165 = pneg %p121
        $region18: #{tpu_custom_call.1} parent=11 // pred_check_branch
          %167 = sbr.rel (%p165) target = $region20
        $region19: #{tpu_custom_call.1} parent=11 // pred_region
          _
        $region20: #{tpu_custom_call.1} parent=11 // pred_fallthru
          _
      $region12: #{tpu_custom_call.1} parent=5 // pred_fallthru
        _
      %p168 = scmp.lt.s32.totalorder %s13, 6
      // Predicated region
      $region21: #{tpu_custom_call.1} parent=5 // pred_check
        %p169 = pneg %p168
      $region22: #{tpu_custom_call.1} parent=5 // pred_check_branch
        %171 = sbr.rel (%p169) target = $region24
      $region23: #{tpu_custom_call.1} parent=5 // pred_region
        // Predicated region
        $region25: #{tpu_custom_call.1} parent=23 // pred_check
          %p172 = pneg %p45
        $region26: #{tpu_custom_call.1} parent=23 // pred_check_branch
          %174 = sbr.rel (%p172) target = $region28
        $region27: #{tpu_custom_call.1} parent=23 // pred_region
          %p175 = scmp.lt.s32.totalorder %s20, 1
          %s176 = scalar_select %p175, %s20, 1
          %s177 = smul.addr %s176, 8
          %s178 = scalar_lea.vmem %s0, %s177
        $region28: #{tpu_custom_call.1} parent=23 // pred_fallthru
          _
        // Predicated region
        $region29: #{tpu_custom_call.1} parent=23 // pred_check
          %p179 = pneg %p73
        $region30: #{tpu_custom_call.1} parent=23 // pred_check_branch
          %181 = sbr.rel (%p179) target = $region32
        $region31: #{tpu_custom_call.1} parent=23 // pred_region
          %s182 = sand.u32 %s63, 1
          %s183 = sand.u32 %s63, 1
          %s184 = smul.addr %s183, 96
          %s185 = scalar_lea.vmem [#allocation3], %s184
          %s186 = smul.u32 8, %s20
          %s187 = smul.u32 3, %s21
          %s188 = ssub.s32 8, %s187
          %p189 = scmp.lt.s32.totalorder %s188, 3
          %s190 = scalar_select %p189, %s188, 3
          %s191 = smul.u32 512, %s190
          %p192 = scmp.ne.s32.totalorder 0, %s191
          %s193 = smul.addr %s186, 8
          %s194 = sadd.s32 %s187, %s193
          %s195 = smul.addr %s194, 4
          %s196 = scalar_lea.vmem %s1, %s195
          // Predicated region
          $region33: #{tpu_custom_call.1} parent=31 // pred_check
            %p197 = pneg %p192
          $region34: #{tpu_custom_call.1} parent=31 // pred_check_branch
            %199 = sbr.rel (%p197) target = $region36
          $region35: #{tpu_custom_call.1} parent=31 // pred_region
            // Predicated region
            $region37: #{tpu_custom_call.1} parent=35 // pred_check
              _
            $region38: #{tpu_custom_call.1} parent=35 // pred_check_branch
              %201 = sbr.rel target = $region40
            $region39: #{tpu_custom_call.1} parent=35 // pred_region
              // Predicated region
              $region59: #{tpu_custom_call.1} parent=39 // pred_check
                _
              $region60: #{tpu_custom_call.1} parent=39 // pred_check_branch
                %312 = sbr.rel (0) target = $region62
              $region61: #{tpu_custom_call.1} parent=39 // pred_region
                %s313 = sdiv.u32.pop %s190, 3
                %s314 = srem.u32.pop %s190, 3
                // While loop
                $region63: #{tpu_custom_call.1} parent=61 // loop_pre_header
                  _
                $region64: #{tpu_custom_call.1} parent=61 // loop_header
                  %s316 = sphi 0, %s318
                  %p317 = scmp.ge.s32.totalorder %s316, %s313
                  %s321 = sphi 0, %s326
                  %s322 = sphi %s196, %s329
                  %s323 = sphi %s185, %s330
                $region65: #{tpu_custom_call.1} parent=61 // loop_header_branch
                  %320 = sbr.rel (%p317) target = $region69
                $region66: #{tpu_custom_call.1} parent=61 // loop_body
                  %s324 = sadd.s32 1, %s321
                  %p325 = scmp.ge.s32.totalorder %s324, %s313
                  %s326 = scalar_select %p325, 0, %s324
                  %s327 = smul.u32 %s326, 12
                  %s328 = smul.u32 %s326, 12
                  %s329 = scalar_lea.vmem %s196, %s327
                  %s330 = scalar_lea.vmem %s185, %s328 [#allocation3]
                $region67: #{tpu_custom_call.1} parent=61 // loop_footer
                  %s318 = sadd.s32 %s316, 1
                $region68: #{tpu_custom_call.1} parent=61 // loop_footer_branch
                  %315 = sbr.rel target = $region64
                $region69: #{tpu_custom_call.1} parent=61 // loop_exit
                  _
                %s331 = sdiv.u32.pop %s190, 3
                %s332 = srem.u32.pop %s190, 3
                %s333 = smul.u32 %s331, 3
                %s334 = smul.u32 4, %s333
                %s335 = scalar_lea.vmem %s196, %s334
                %s336 = smul.u32 4, %s333
                %s337 = scalar_lea.vmem %s185, %s336 [#allocation3]
                // While loop
                $region70: #{tpu_custom_call.1} parent=61 // loop_pre_header
                  _
                $region71: #{tpu_custom_call.1} parent=61 // loop_header
                  %s339 = sphi 0, %s341
                  %p340 = scmp.ge.s32.totalorder %s339, %s332
                  %s344 = sphi 0, %s349
                  %s345 = sphi %s335, %s352
                  %s346 = sphi %s337, %s353
                $region72: #{tpu_custom_call.1} parent=61 // loop_header_branch
                  %343 = sbr.rel (%p340) target = $region76
                $region73: #{tpu_custom_call.1} parent=61 // loop_body
                  %s347 = sadd.s32 1, %s344
                  %p348 = scmp.ge.s32.totalorder %s347, %s332
                  %s349 = scalar_select %p348, 0, %s347
                  %s350 = smul.u32 %s349, 4
                  %s351 = smul.u32 %s349, 4
                  %s352 = scalar_lea.vmem %s335, %s350
                  %s353 = scalar_lea.vmem %s337, %s351 [#allocation3]
                $region74: #{tpu_custom_call.1} parent=61 // loop_footer
                  %s341 = sadd.s32 %s339, 1
                $region75: #{tpu_custom_call.1} parent=61 // loop_footer_branch
                  %338 = sbr.rel target = $region71
                $region76: #{tpu_custom_call.1} parent=61 // loop_exit
                  _
                %s355 = ssub.s32 16, 1
                %s356 = sdiv.u32.pop %s190, 3
                %s357 = srem.u32.pop %s190, 3
                // While loop
                $region77: #{tpu_custom_call.1} parent=61 // loop_pre_header
                  _
                $region78: #{tpu_custom_call.1} parent=61 // loop_header
                  %s359 = sphi 0, %s361
                  %p360 = scmp.ge.s32.totalorder %s359, %s356
                  %s364 = sphi 0, %s417
                  %s365 = sphi %s196, %s420
                  %s366 = sphi %s185, %s421
                $region79: #{tpu_custom_call.1} parent=61 // loop_header_branch
                  %363 = sbr.rel (%p360) target = $region83
                $region80: #{tpu_custom_call.1} parent=61 // loop_body
                  %v367 = vld [vmem:[%s365] sm:%s355]
                  %368 = vst [vmem:[%s366] sm:%s355] %v367
                  %v369 = vld [vmem:[%s365 + $0x4] sm:%s355]
                  %370 = vst [vmem:[%s366 + $0x4] sm:%s355] %v369
                  %v371 = vld [vmem:[%s365 + $0x8] sm:%s355]
                  %372 = vst [vmem:[%s366 + $0x8] sm:%s355] %v371
                  %v373 = vld [vmem:[%s365 + $0x20] sm:%s355]
                  %374 = vst [vmem:[%s366 + $0xc] sm:%s355] %v373
                  %v375 = vld [vmem:[%s365 + $0x24] sm:%s355]
                  %376 = vst [vmem:[%s366 + $0x10] sm:%s355] %v375
                  %v377 = vld [vmem:[%s365 + $0x28] sm:%s355]
                  %378 = vst [vmem:[%s366 + $0x14] sm:%s355] %v377
                  %v379 = vld [vmem:[%s365 + $0x40] sm:%s355]
                  %380 = vst [vmem:[%s366 + $0x18] sm:%s355] %v379
                  %v381 = vld [vmem:[%s365 + $0x44] sm:%s355]
                  %382 = vst [vmem:[%s366 + $0x1c] sm:%s355] %v381
                  %v383 = vld [vmem:[%s365 + $0x48] sm:%s355]
                  %384 = vst [vmem:[%s366 + $0x20] sm:%s355] %v383
                  %v385 = vld [vmem:[%s365 + $0x60] sm:%s355]
                  %386 = vst [vmem:[%s366 + $0x24] sm:%s355] %v385
                  %v387 = vld [vmem:[%s365 + $0x64] sm:%s355]
                  %388 = vst [vmem:[%s366 + $0x28] sm:%s355] %v387
                  %v389 = vld [vmem:[%s365 + $0x68] sm:%s355]
                  %390 = vst [vmem:[%s366 + $0x2c] sm:%s355] %v389
                  %v391 = vld [vmem:[%s365 + $0x80] sm:%s355]
                  %392 = vst [vmem:[%s366 + $0x30] sm:%s355] %v391
                  %v393 = vld [vmem:[%s365 + $0x84] sm:%s355]
                  %394 = vst [vmem:[%s366 + $0x34] sm:%s355] %v393
                  %v395 = vld [vmem:[%s365 + $0x88] sm:%s355]
                  %396 = vst [vmem:[%s366 + $0x38] sm:%s355] %v395
                  %v397 = vld [vmem:[%s365 + $0xa0] sm:%s355]
                  %398 = vst [vmem:[%s366 + $0x3c] sm:%s355] %v397
                  %v399 = vld [vmem:[%s365 + $0xa4] sm:%s355]
                  %400 = vst [vmem:[%s366 + $0x40] sm:%s355] %v399
                  %v401 = vld [vmem:[%s365 + $0xa8] sm:%s355]
                  %402 = vst [vmem:[%s366 + $0x44] sm:%s355] %v401
                  %v403 = vld [vmem:[%s365 + $0xc0] sm:%s355]
                  %404 = vst [vmem:[%s366 + $0x48] sm:%s355] %v403
                  %v405 = vld [vmem:[%s365 + $0xc4] sm:%s355]
                  %406 = vst [vmem:[%s366 + $0x4c] sm:%s355] %v405
                  %v407 = vld [vmem:[%s365 + $0xc8] sm:%s355]
                  %408 = vst [vmem:[%s366 + $0x50] sm:%s355] %v407
                  %v409 = vld [vmem:[%s365 + $0xe0] sm:%s355]
                  %410 = vst [vmem:[%s366 + $0x54] sm:%s355] %v409
                  %v411 = vld [vmem:[%s365 + $0xe4] sm:%s355]
                  %412 = vst [vmem:[%s366 + $0x58] sm:%s355] %v411
                  %v413 = vld [vmem:[%s365 + $0xe8] sm:%s355]
                  %414 = vst [vmem:[%s366 + $0x5c] sm:%s355] %v413
                  %s415 = sadd.s32 1, %s364
                  %p416 = scmp.ge.s32.totalorder %s415, %s356
                  %s417 = scalar_select %p416, 0, %s415
                  %s418 = smul.u32 %s417, 12
                  %s419 = smul.u32 %s417, 12
                  %s420 = scalar_lea.vmem %s196, %s418
                  %s421 = scalar_lea.vmem %s185, %s419 [#allocation3]
                $region81: #{tpu_custom_call.1} parent=61 // loop_footer
                  %s361 = sadd.s32 %s359, 1
                $region82: #{tpu_custom_call.1} parent=61 // loop_footer_branch
                  %358 = sbr.rel target = $region78
                $region83: #{tpu_custom_call.1} parent=61 // loop_exit
                  _
                %s422 = sdiv.u32.pop %s190, 3
                %s423 = srem.u32.pop %s190, 3
                %s424 = smul.u32 %s422, 3
                %s425 = smul.u32 4, %s424
                %s426 = scalar_lea.vmem %s196, %s425
                %s427 = smul.u32 4, %s424
                %s428 = scalar_lea.vmem %s185, %s427 [#allocation3]
                // While loop
                $region84: #{tpu_custom_call.1} parent=61 // loop_pre_header
                  _
                $region85: #{tpu_custom_call.1} parent=61 // loop_header
                  %s430 = sphi 0, %s432
                  %p431 = scmp.ge.s32.totalorder %s430, %s423
                  %s435 = sphi 0, %s456
                  %s436 = sphi %s426, %s459
                  %s437 = sphi %s428, %s460
                $region86: #{tpu_custom_call.1} parent=61 // loop_header_branch
                  %434 = sbr.rel (%p431) target = $region90
                $region87: #{tpu_custom_call.1} parent=61 // loop_body
                  %v438 = vld [vmem:[%s436] sm:%s355]
                  %439 = vst [vmem:[%s437] sm:%s355] %v438
                  %v440 = vld [vmem:[%s436 + $0x20] sm:%s355]
                  %441 = vst [vmem:[%s437 + $0xc] sm:%s355] %v440
                  %v442 = vld [vmem:[%s436 + $0x40] sm:%s355]
                  %443 = vst [vmem:[%s437 + $0x18] sm:%s355] %v442
                  %v444 = vld [vmem:[%s436 + $0x60] sm:%s355]
                  %445 = vst [vmem:[%s437 + $0x24] sm:%s355] %v444
                  %v446 = vld [vmem:[%s436 + $0x80] sm:%s355]
                  %447 = vst [vmem:[%s437 + $0x30] sm:%s355] %v446
                  %v448 = vld [vmem:[%s436 + $0xa0] sm:%s355]
                  %449 = vst [vmem:[%s437 + $0x3c] sm:%s355] %v448
                  %v450 = vld [vmem:[%s436 + $0xc0] sm:%s355]
                  %451 = vst [vmem:[%s437 + $0x48] sm:%s355] %v450
                  %v452 = vld [vmem:[%s436 + $0xe0] sm:%s355]
                  %453 = vst [vmem:[%s437 + $0x54] sm:%s355] %v452
                  %s454 = sadd.s32 1, %s435
                  %p455 = scmp.ge.s32.totalorder %s454, %s423
                  %s456 = scalar_select %p455, 0, %s454
                  %s457 = smul.u32 %s456, 4
                  %s458 = smul.u32 %s456, 4
                  %s459 = scalar_lea.vmem %s426, %s457
                  %s460 = scalar_lea.vmem %s428, %s458 [#allocation3]
                $region88: #{tpu_custom_call.1} parent=61 // loop_footer
                  %s432 = sadd.s32 %s430, 1
                $region89: #{tpu_custom_call.1} parent=61 // loop_footer_branch
                  %429 = sbr.rel target = $region85
                $region90: #{tpu_custom_call.1} parent=61 // loop_exit
                  _
              $region62: #{tpu_custom_call.1} parent=39 // pred_fallthru
                _
            $region40: #{tpu_custom_call.1} parent=35 // pred_fallthru
              _
            // Predicated region
            $region41: #{tpu_custom_call.1} parent=35 // pred_check
              _
            $region42: #{tpu_custom_call.1} parent=35 // pred_check_branch
              %203 = sbr.rel (0) target = $region44
            $region43: #{tpu_custom_call.1} parent=35 // pred_region
              %s205 = ssub.s32 16, 1
              %s206 = sdiv.u32.pop %s190, 3
              %s207 = srem.u32.pop %s190, 3
              // While loop
              $region45: #{tpu_custom_call.1} parent=43 // loop_pre_header
                _
              $region46: #{tpu_custom_call.1} parent=43 // loop_header
                %s209 = sphi 0, %s211
                %p210 = scmp.ge.s32.totalorder %s209, %s206
                %s214 = sphi 0, %s267
                %s215 = sphi %s196, %s270
                %s216 = sphi %s185, %s271
              $region47: #{tpu_custom_call.1} parent=43 // loop_header_branch
                %213 = sbr.rel (%p210) target = $region51
              $region48: #{tpu_custom_call.1} parent=43 // loop_body
                %v217 = vld [vmem:[%s215] sm:%s205]
                %218 = vst [vmem:[%s216] sm:%s205] %v217
                %v219 = vld [vmem:[%s215 + $0x4] sm:%s205]
                %220 = vst [vmem:[%s216 + $0x4] sm:%s205] %v219
                %v221 = vld [vmem:[%s215 + $0x8] sm:%s205]
                %222 = vst [vmem:[%s216 + $0x8] sm:%s205] %v221
                %v223 = vld [vmem:[%s215 + $0x20] sm:%s205]
                %224 = vst [vmem:[%s216 + $0xc] sm:%s205] %v223
                %v225 = vld [vmem:[%s215 + $0x24] sm:%s205]
                %226 = vst [vmem:[%s216 + $0x10] sm:%s205] %v225
                %v227 = vld [vmem:[%s215 + $0x28] sm:%s205]
                %228 = vst [vmem:[%s216 + $0x14] sm:%s205] %v227
                %v229 = vld [vmem:[%s215 + $0x40] sm:%s205]
                %230 = vst [vmem:[%s216 + $0x18] sm:%s205] %v229
                %v231 = vld [vmem:[%s215 + $0x44] sm:%s205]
                %232 = vst [vmem:[%s216 + $0x1c] sm:%s205] %v231
                %v233 = vld [vmem:[%s215 + $0x48] sm:%s205]
                %234 = vst [vmem:[%s216 + $0x20] sm:%s205] %v233
                %v235 = vld [vmem:[%s215 + $0x60] sm:%s205]
                %236 = vst [vmem:[%s216 + $0x24] sm:%s205] %v235
                %v237 = vld [vmem:[%s215 + $0x64] sm:%s205]
                %238 = vst [vmem:[%s216 + $0x28] sm:%s205] %v237
                %v239 = vld [vmem:[%s215 + $0x68] sm:%s205]
                %240 = vst [vmem:[%s216 + $0x2c] sm:%s205] %v239
                %v241 = vld [vmem:[%s215 + $0x80] sm:%s205]
                %242 = vst [vmem:[%s216 + $0x30] sm:%s205] %v241
                %v243 = vld [vmem:[%s215 + $0x84] sm:%s205]
                %244 = vst [vmem:[%s216 + $0x34] sm:%s205] %v243
                %v245 = vld [vmem:[%s215 + $0x88] sm:%s205]
                %246 = vst [vmem:[%s216 + $0x38] sm:%s205] %v245
                %v247 = vld [vmem:[%s215 + $0xa0] sm:%s205]
                %248 = vst [vmem:[%s216 + $0x3c] sm:%s205] %v247
                %v249 = vld [vmem:[%s215 + $0xa4] sm:%s205]
                %250 = vst [vmem:[%s216 + $0x40] sm:%s205] %v249
                %v251 = vld [vmem:[%s215 + $0xa8] sm:%s205]
                %252 = vst [vmem:[%s216 + $0x44] sm:%s205] %v251
                %v253 = vld [vmem:[%s215 + $0xc0] sm:%s205]
                %254 = vst [vmem:[%s216 + $0x48] sm:%s205] %v253
                %v255 = vld [vmem:[%s215 + $0xc4] sm:%s205]
                %256 = vst [vmem:[%s216 + $0x4c] sm:%s205] %v255
                %v257 = vld [vmem:[%s215 + $0xc8] sm:%s205]
                %258 = vst [vmem:[%s216 + $0x50] sm:%s205] %v257
                %v259 = vld [vmem:[%s215 + $0xe0] sm:%s205]
                %260 = vst [vmem:[%s216 + $0x54] sm:%s205] %v259
                %v261 = vld [vmem:[%s215 + $0xe4] sm:%s205]
                %262 = vst [vmem:[%s216 + $0x58] sm:%s205] %v261
                %v263 = vld [vmem:[%s215 + $0xe8] sm:%s205]
                %264 = vst [vmem:[%s216 + $0x5c] sm:%s205] %v263
                %s265 = sadd.s32 1, %s214
                %p266 = scmp.ge.s32.totalorder %s265, %s206
                %s267 = scalar_select %p266, 0, %s265
                %s268 = smul.u32 %s267, 12
                %s269 = smul.u32 %s267, 12
                %s270 = scalar_lea.vmem %s196, %s268
                %s271 = scalar_lea.vmem %s185, %s269 [#allocation3]
              $region49: #{tpu_custom_call.1} parent=43 // loop_footer
                %s211 = sadd.s32 %s209, 1
              $region50: #{tpu_custom_call.1} parent=43 // loop_footer_branch
                %208 = sbr.rel target = $region46
              $region51: #{tpu_custom_call.1} parent=43 // loop_exit
                _
              %s272 = sdiv.u32.pop %s190, 3
              %s273 = srem.u32.pop %s190, 3
              %s274 = smul.u32 %s272, 3
              %s275 = smul.u32 4, %s274
              %s276 = scalar_lea.vmem %s196, %s275
              %s277 = smul.u32 4, %s274
              %s278 = scalar_lea.vmem %s185, %s277 [#allocation3]
              // While loop
              $region52: #{tpu_custom_call.1} parent=43 // loop_pre_header
                _
              $region53: #{tpu_custom_call.1} parent=43 // loop_header
                %s280 = sphi 0, %s282
                %p281 = scmp.ge.s32.totalorder %s280, %s273
                %s285 = sphi 0, %s306
                %s286 = sphi %s276, %s309
                %s287 = sphi %s278, %s310
              $region54: #{tpu_custom_call.1} parent=43 // loop_header_branch
                %284 = sbr.rel (%p281) target = $region58
              $region55: #{tpu_custom_call.1} parent=43 // loop_body
                %v288 = vld [vmem:[%s286] sm:%s205]
                %289 = vst [vmem:[%s287] sm:%s205] %v288
                %v290 = vld [vmem:[%s286 + $0x20] sm:%s205]
                %291 = vst [vmem:[%s287 + $0xc] sm:%s205] %v290
                %v292 = vld [vmem:[%s286 + $0x40] sm:%s205]
                %293 = vst [vmem:[%s287 + $0x18] sm:%s205] %v292
                %v294 = vld [vmem:[%s286 + $0x60] sm:%s205]
                %295 = vst [vmem:[%s287 + $0x24] sm:%s205] %v294
                %v296 = vld [vmem:[%s286 + $0x80] sm:%s205]
                %297 = vst [vmem:[%s287 + $0x30] sm:%s205] %v296
                %v298 = vld [vmem:[%s286 + $0xa0] sm:%s205]
                %299 = vst [vmem:[%s287 + $0x3c] sm:%s205] %v298
                %v300 = vld [vmem:[%s286 + $0xc0] sm:%s205]
                %301 = vst [vmem:[%s287 + $0x48] sm:%s205] %v300
                %v302 = vld [vmem:[%s286 + $0xe0] sm:%s205]
                %303 = vst [vmem:[%s287 + $0x54] sm:%s205] %v302
                %s304 = sadd.s32 1, %s285
                %p305 = scmp.ge.s32.totalorder %s304, %s273
                %s306 = scalar_select %p305, 0, %s304
                %s307 = smul.u32 %s306, 4
                %s308 = smul.u32 %s306, 4
                %s309 = scalar_lea.vmem %s276, %s307
                %s310 = scalar_lea.vmem %s278, %s308 [#allocation3]
              $region56: #{tpu_custom_call.1} parent=43 // loop_footer
                %s282 = sadd.s32 %s280, 1
              $region57: #{tpu_custom_call.1} parent=43 // loop_footer_branch
                %279 = sbr.rel target = $region53
              $region58: #{tpu_custom_call.1} parent=43 // loop_exit
                _
            $region44: #{tpu_custom_call.1} parent=35 // pred_fallthru
              _
          $region36: #{tpu_custom_call.1} parent=31 // pred_fallthru
            _
          %461 = vnop
        $region32: #{tpu_custom_call.1} parent=23 // pred_fallthru
          _
      $region24: #{tpu_custom_call.1} parent=5 // pred_fallthru
        _
      %p462 = scmp.le.s32.totalorder 1, %s13
      %p463 = scmp.lt.s32.totalorder %s13, 7
      %p464 = pnand %p462, %p463
      %p465 = pneg %p464
      // Predicated region
      $region91: #{tpu_custom_call.1} parent=5 // pred_check
        _
      $region92: #{tpu_custom_call.1} parent=5 // pred_check_branch
        %467 = sbr.rel (%p464) target = $region94
      $region93: #{tpu_custom_call.1} parent=5 // pred_region
        %s468 = ssub.s32 %s13, 1
        %s469 = sand.u32 %s66, 1
        %s470 = sand.u32 %s66, 1
        %s471 = smul.addr %s470, 96
        %s472 = scalar_lea.vmem [#allocation3], %s471
        // Predicated region
        $region95: #{tpu_custom_call.1} parent=93 // pred_check
          %p473 = pneg %p79
        $region96: #{tpu_custom_call.1} parent=93 // pred_check_branch
          %475 = sbr.rel (%p473) target = $region98
        $region97: #{tpu_custom_call.1} parent=93 // pred_region
          _
        $region98: #{tpu_custom_call.1} parent=93 // pred_fallthru
          _
        %p476 = scmp.lt.s32.totalorder %s22, 1
        %s477 = scalar_select %p476, %s22, 1
        %s478 = smul.addr %s477, 8
        %s479 = scalar_lea.vmem %s0, %s478
        %p480 = pneg %p51
        %p481 = pneg %p48
        %s482 = sand.u32 %s66, 1
        %s483 = sand.u32 %s66, 1
        %s484 = smul.addr %s483, 96
        %s485 = scalar_lea.vmem [#allocation3], %s484
        %p486 = pneg %p79
        %p487 = pneg %p76
        %p488 = pneg %p100
        %p489 = pneg %p97
        %p490 = pneg %p121
        %p491 = pneg %p118
        %p492 = pneg %p147
        %p493 = pneg %p144
        %s494 = sand.u32 %s134, 1
        %s495 = scalar_lea.sflag [#allocation5], %s494
        %s496 = sand.u32 %s134, 1
        %s497 = smul.addr %s496, 8
        %s498 = scalar_lea.vmem [#allocation4], %s497
        %p499 = scmp.lt.s32.totalorder %s22, 1
        %s500 = scalar_select %p499, %s22, 1
        %s501 = smul.addr %s500, 8
        %s502 = scalar_lea.vmem %s0, %s501
        %s503 = smul.u32 8, %s22
        %s504 = smul.u32 3, %s23
        %s505 = ssub.s32 8, %s504
        %p506 = scmp.lt.s32.totalorder %s505, 3
        %s507 = scalar_select %p506, %s505, 3
        %s508 = smul.u32 512, %s507
        %p509 = scmp.eq.s32.totalorder %s23, 0
        // Predicated region
        $region99: #{tpu_custom_call.1} parent=93 // pred_check
          %p510 = pneg %p509
        $region100: #{tpu_custom_call.1} parent=93 // pred_check_branch
          %512 = sbr.rel (%p510) target = $region102
        $region101: #{tpu_custom_call.1} parent=93 // pred_region
          %vm513 = vcmask 261120
          %514 = vst.msk [vmem:[#allocation2] sm:$0xff] %vm513, 0.0
        $region102: #{tpu_custom_call.1} parent=93 // pred_fallthru
          _
        %v515 = vlaneseq
        %v516 = vshrl.u32 %v515, 7
        %v517 = vadd.s32 %v516, 8
        %v518 = vadd.s32 %v516, 16
        %s519 = smul.u32 %s23, 24
        %v520 = vstv %s519
        %v521 = vadd.s32 %v516, %v520
        %v522 = vadd.s32 %v517, %v520
        %v523 = vadd.s32 %v518, %v520
        %v524 = vld [vmem:[%s502] sm:$0xff]
        %v525 = vcombine.high %v524, %v524
        %v527 = vunpack.c.l.s4 1966171168
        %v528 = vunpack.c.0.s8 %v527
        %v529 = vlaneseq
        %v530 = vshrl.u32 %v529, 7
        %v531 = vsub.s32 %v528, %v530
        %v532 = vrot.slane %v524, %v531
        %v534 = vunpack.c.l.s4 1966171168
        %v535 = vunpack.c.0.s8 %v534
        %v536 = vlaneseq
        %v537 = vshrl.u32 %v536, 7
        %v538 = vsub.s32 %v535, %v537
        %v539 = vrot.slane %v525, %v538
        %v540 = vcombine.high %v532, %v532
        %v541 = vcombine.high %v539, %v539
        %v543 = vunpack.c.l.s4 1966171168
        %v544 = vunpack.c.0.s8 %v543
        %v545 = vlaneseq
        %v546 = vshrl.u32 %v545, 7
        %v547 = vsub.s32 %v544, %v546
        %v548 = vrot.slane %v532, %v547
        %v550 = vunpack.c.l.s4 1966171168
        %v551 = vunpack.c.0.s8 %v550
        %v552 = vlaneseq
        %v553 = vshrl.u32 %v552, 7
        %v554 = vsub.s32 %v551, %v553
        %v555 = vrot.slane %v539, %v554
        %v557 = vunpack.c.l.s4 1966171168
        %v558 = vunpack.c.0.s8 %v557
        %v559 = vlaneseq
        %v560 = vshrl.u32 %v559, 7
        %v561 = vsub.s32 %v558, %v560
        %v562 = vrot.slane %v540, %v561
        %v564 = vunpack.c.l.s4 1966171168
        %v565 = vunpack.c.0.s8 %v564
        %v566 = vlaneseq
        %v567 = vshrl.u32 %v566, 7
        %v568 = vsub.s32 %v565, %v567
        %v569 = vrot.slane %v541, %v568
        %v570 = vcombine.high %v548, %v548
        %v571 = vcombine.high %v555, %v555
        %v572 = vcombine.high %v562, %v562
        %v573 = vcombine.high %v569, %v569
        %vm574 = vcmp.ge.s32.totalorder %v521, 1
        %vm575 = vcmp.ge.s32.totalorder %v522, 1
        %vm576 = vcmp.ge.s32.totalorder %v523, 1
        %v577 = vsub.s32 %v548, 1
        %v578 = vsub.s32 %v562, 1
        %v579 = vsub.s32 %v570, 1
        %v580 = vsub.s32 %v572, 1
        %v581 = vsub.s32 %v555, 1
        %v582 = vsub.s32 %v569, 1
        %v583 = vsub.s32 %v571, 1
        %v584 = vsub.s32 %v573, 1
        %v585 = vlaneseq
        %v586 = vshrl.u32 %v585, 7
        %v587 = vsub.s32 0, %v586
        %v588 = vrot.slane %v577, %v587
        %v589 = vlaneseq
        %v590 = vshrl.u32 %v589, 7
        %v591 = vsub.s32 0, %v590
        %v592 = vrot.slane %v578, %v591
        %v593 = vlaneseq
        %v594 = vshrl.u32 %v593, 7
        %v595 = vsub.s32 0, %v594
        %v596 = vrot.slane %v579, %v595
        %v597 = vlaneseq
        %v598 = vshrl.u32 %v597, 7
        %v599 = vsub.s32 0, %v598
        %v600 = vrot.slane %v580, %v599
        %v601 = vlaneseq
        %v602 = vshrl.u32 %v601, 7
        %v603 = vsub.s32 0, %v602
        %v604 = vrot.slane %v581, %v603
        %v605 = vlaneseq
        %v606 = vshrl.u32 %v605, 7
        %v607 = vsub.s32 0, %v606
        %v608 = vrot.slane %v582, %v607
        %v609 = vlaneseq
        %v610 = vshrl.u32 %v609, 7
        %v611 = vsub.s32 0, %v610
        %v612 = vrot.slane %v583, %v611
        %v613 = vlaneseq
        %v614 = vshrl.u32 %v613, 7
        %v615 = vsub.s32 0, %v614
        %v616 = vrot.slane %v584, %v615
        %vm617 = vcmp.lt.s32.totalorder %v521, %v588
        %vm618 = vcmp.lt.s32.totalorder %v522, %v588
        %vm619 = vcmp.lt.s32.totalorder %v523, %v588
        %vm620 = vcmp.lt.s32.totalorder %v521, %v592
        %vm621 = vcmp.lt.s32.totalorder %v522, %v592
        %vm622 = vcmp.lt.s32.totalorder %v523, %v592
        %vm623 = vcmp.lt.s32.totalorder %v521, %v596
        %vm624 = vcmp.lt.s32.totalorder %v522, %v596
        %vm625 = vcmp.lt.s32.totalorder %v523, %v596
        %vm626 = vcmp.lt.s32.totalorder %v521, %v600
        %vm627 = vcmp.lt.s32.totalorder %v522, %v600
        %vm628 = vcmp.lt.s32.totalorder %v523, %v600
        %vm629 = vcmp.lt.s32.totalorder %v521, %v604
        %vm630 = vcmp.lt.s32.totalorder %v522, %v604
        %vm631 = vcmp.lt.s32.totalorder %v523, %v604
        %vm632 = vcmp.lt.s32.totalorder %v521, %v608
        %vm633 = vcmp.lt.s32.totalorder %v522, %v608
        %vm634 = vcmp.lt.s32.totalorder %v523, %v608
        %vm635 = vcmp.lt.s32.totalorder %v521, %v612
        %vm636 = vcmp.lt.s32.totalorder %v522, %v612
        %vm637 = vcmp.lt.s32.totalorder %v523, %v612
        %vm638 = vcmp.lt.s32.totalorder %v521, %v616
        %vm639 = vcmp.lt.s32.totalorder %v522, %v616
        %vm640 = vcmp.lt.s32.totalorder %v523, %v616
        %vm641 = vmand %vm574, %vm617
        %vm642 = vmand %vm575, %vm618
        %vm643 = vmand %vm576, %vm619
        %vm644 = vmand %vm574, %vm620
        %vm645 = vmand %vm575, %vm621
        %vm646 = vmand %vm576, %vm622
        %vm647 = vmand %vm574, %vm623
        %vm648 = vmand %vm575, %vm624
        %vm649 = vmand %vm576, %vm625
        %vm650 = vmand %vm574, %vm626
        %vm651 = vmand %vm575, %vm627
        %vm652 = vmand %vm576, %vm628
        %vm653 = vmand %vm574, %vm629
        %vm654 = vmand %vm575, %vm630
        %vm655 = vmand %vm576, %vm631
        %vm656 = vmand %vm574, %vm632
        %vm657 = vmand %vm575, %vm633
        %vm658 = vmand %vm576, %vm634
        %vm659 = vmand %vm574, %vm635
        %vm660 = vmand %vm575, %vm636
        %vm661 = vmand %vm576, %vm637
        %vm662 = vmand %vm574, %vm638
        %vm663 = vmand %vm575, %vm639
        %vm664 = vmand %vm576, %vm640
        %v665 = vld [vmem:[%s472] sm:$0xf]
        %v666 = vld [vmem:[%s472 + $0x4] sm:$0xf]
        %v667 = vld [vmem:[%s472 + $0x8] sm:$0xf]
        %v668 = vld [vmem:[%s472 + $0xc] sm:$0xf]
        %v669 = vld [vmem:[%s472 + $0x10] sm:$0xf]
        %v670 = vld [vmem:[%s472 + $0x14] sm:$0xf]
        %v671 = vld [vmem:[%s472 + $0x18] sm:$0xf]
        %v672 = vld [vmem:[%s472 + $0x1c] sm:$0xf]
        %v673 = vld [vmem:[%s472 + $0x20] sm:$0xf]
        %v674 = vld [vmem:[%s472 + $0x24] sm:$0xf]
        %v675 = vld [vmem:[%s472 + $0x28] sm:$0xf]
        %v676 = vld [vmem:[%s472 + $0x2c] sm:$0xf]
        %v677 = vld [vmem:[%s472 + $0x30] sm:$0xf]
        %v678 = vld [vmem:[%s472 + $0x34] sm:$0xf]
        %v679 = vld [vmem:[%s472 + $0x38] sm:$0xf]
        %v680 = vld [vmem:[%s472 + $0x3c] sm:$0xf]
        %v681 = vld [vmem:[%s472 + $0x40] sm:$0xf]
        %v682 = vld [vmem:[%s472 + $0x44] sm:$0xf]
        %v683 = vld [vmem:[%s472 + $0x48] sm:$0xf]
        %v684 = vld [vmem:[%s472 + $0x4c] sm:$0xf]
        %v685 = vld [vmem:[%s472 + $0x50] sm:$0xf]
        %v686 = vld [vmem:[%s472 + $0x54] sm:$0xf]
        %v687 = vld [vmem:[%s472 + $0x58] sm:$0xf]
        %v688 = vld [vmem:[%s472 + $0x5c] sm:$0xf]
        %v689 = vunpack.c.l.bf16 %v665
        %v690 = vunpack.c.l.bf16 %v666
        %v691 = vunpack.c.l.bf16 %v667
        %v692 = vunpack.c.l.bf16 %v668
        %v693 = vunpack.c.l.bf16 %v669
        %v694 = vunpack.c.l.bf16 %v670
        %v695 = vunpack.c.l.bf16 %v671
        %v696 = vunpack.c.l.bf16 %v672
        %v697 = vunpack.c.l.bf16 %v673
        %v698 = vunpack.c.l.bf16 %v674
        %v699 = vunpack.c.l.bf16 %v675
        %v700 = vunpack.c.l.bf16 %v676
        %v701 = vunpack.c.l.bf16 %v677
        %v702 = vunpack.c.l.bf16 %v678
        %v703 = vunpack.c.l.bf16 %v679
        %v704 = vunpack.c.l.bf16 %v680
        %v705 = vunpack.c.l.bf16 %v681
        %v706 = vunpack.c.l.bf16 %v682
        %v707 = vunpack.c.l.bf16 %v683
        %v708 = vunpack.c.l.bf16 %v684
        %v709 = vunpack.c.l.bf16 %v685
        %v710 = vunpack.c.l.bf16 %v686
        %v711 = vunpack.c.l.bf16 %v687
        %v712 = vunpack.c.l.bf16 %v688
        %v713 = vsel %vm641, 1, 0
        %v714 = vsel %vm642, 1, 0
        %v715 = vsel %vm643, 1, 0
        %v716 = vsel %vm644, 1, 0
        %v717 = vsel %vm645, 1, 0
        %v718 = vsel %vm646, 1, 0
        %v719 = vsel %vm647, 1, 0
        %v720 = vsel %vm648, 1, 0
        %v721 = vsel %vm649, 1, 0
        %v722 = vsel %vm650, 1, 0
        %v723 = vsel %vm651, 1, 0
        %v724 = vsel %vm652, 1, 0
        %v725 = vsel %vm653, 1, 0
        %v726 = vsel %vm654, 1, 0
        %v727 = vsel %vm655, 1, 0
        %v728 = vsel %vm656, 1, 0
        %v729 = vsel %vm657, 1, 0
        %v730 = vsel %vm658, 1, 0
        %v731 = vsel %vm659, 1, 0
        %v732 = vsel %vm660, 1, 0
        %v733 = vsel %vm661, 1, 0
        %v734 = vsel %vm662, 1, 0
        %v735 = vsel %vm663, 1, 0
        %v736 = vsel %vm664, 1, 0
        %737 = vset.pattern.permute.xlu0 0
        %738 = vperm.xlu0 %737, %v713
        %v739 = vpop.permute.xlu0 %738
        %740 = vset.pattern.permute.xlu0 0
        %741 = vperm.xlu0 %740, %v714
        %v742 = vpop.permute.xlu0 %741
        %743 = vset.pattern.permute.xlu0 0
        %744 = vperm.xlu0 %743, %v715
        %v745 = vpop.permute.xlu0 %744
        %746 = vset.pattern.permute.xlu0 0
        %747 = vperm.xlu0 %746, %v716
        %v748 = vpop.permute.xlu0 %747
        %749 = vset.pattern.permute.xlu0 0
        %750 = vperm.xlu0 %749, %v717
        %v751 = vpop.permute.xlu0 %750
        %752 = vset.pattern.permute.xlu0 0
        %753 = vperm.xlu0 %752, %v718
        %v754 = vpop.permute.xlu0 %753
        %755 = vset.pattern.permute.xlu0 0
        %756 = vperm.xlu0 %755, %v719
        %v757 = vpop.permute.xlu0 %756
        %758 = vset.pattern.permute.xlu0 0
        %759 = vperm.xlu0 %758, %v720
        %v760 = vpop.permute.xlu0 %759
        %761 = vset.pattern.permute.xlu0 0
        %762 = vperm.xlu0 %761, %v721
        %v763 = vpop.permute.xlu0 %762
        %764 = vset.pattern.permute.xlu0 0
        %765 = vperm.xlu0 %764, %v722
        %v766 = vpop.permute.xlu0 %765
        %767 = vset.pattern.permute.xlu0 0
        %768 = vperm.xlu0 %767, %v723
        %v769 = vpop.permute.xlu0 %768
        %770 = vset.pattern.permute.xlu0 0
        %771 = vperm.xlu0 %770, %v724
        %v772 = vpop.permute.xlu0 %771
        %773 = vset.pattern.permute.xlu0 0
        %774 = vperm.xlu0 %773, %v725
        %v775 = vpop.permute.xlu0 %774
        %776 = vset.pattern.permute.xlu0 0
        %777 = vperm.xlu0 %776, %v726
        %v778 = vpop.permute.xlu0 %777
        %779 = vset.pattern.permute.xlu0 0
        %780 = vperm.xlu0 %779, %v727
        %v781 = vpop.permute.xlu0 %780
        %782 = vset.pattern.permute.xlu0 0
        %783 = vperm.xlu0 %782, %v728
        %v784 = vpop.permute.xlu0 %783
        %785 = vset.pattern.permute.xlu0 0
        %786 = vperm.xlu0 %785, %v729
        %v787 = vpop.permute.xlu0 %786
        %788 = vset.pattern.permute.xlu0 0
        %789 = vperm.xlu0 %788, %v730
        %v790 = vpop.permute.xlu0 %789
        %791 = vset.pattern.permute.xlu0 0
        %792 = vperm.xlu0 %791, %v731
        %v793 = vpop.permute.xlu0 %792
        %794 = vset.pattern.permute.xlu0 0
        %795 = vperm.xlu0 %794, %v732
        %v796 = vpop.permute.xlu0 %795
        %797 = vset.pattern.permute.xlu0 0
        %798 = vperm.xlu0 %797, %v733
        %v799 = vpop.permute.xlu0 %798
        %800 = vset.pattern.permute.xlu0 0
        %801 = vperm.xlu0 %800, %v734
        %v802 = vpop.permute.xlu0 %801
        %803 = vset.pattern.permute.xlu0 0
        %804 = vperm.xlu0 %803, %v735
        %v805 = vpop.permute.xlu0 %804
        %806 = vset.pattern.permute.xlu0 0
        %807 = vperm.xlu0 %806, %v736
        %v808 = vpop.permute.xlu0 %807
        %vm809 = vcmp.eq.s32.totalorder %v739, 1
        %vm810 = vcmp.eq.s32.totalorder %v742, 1
        %vm811 = vcmp.eq.s32.totalorder %v745, 1
        %vm812 = vcmp.eq.s32.totalorder %v748, 1
        %vm813 = vcmp.eq.s32.totalorder %v751, 1
        %vm814 = vcmp.eq.s32.totalorder %v754, 1
        %vm815 = vcmp.eq.s32.totalorder %v757, 1
        %vm816 = vcmp.eq.s32.totalorder %v760, 1
        %vm817 = vcmp.eq.s32.totalorder %v763, 1
        %vm818 = vcmp.eq.s32.totalorder %v766, 1
        %vm819 = vcmp.eq.s32.totalorder %v769, 1
        %vm820 = vcmp.eq.s32.totalorder %v772, 1
        %vm821 = vcmp.eq.s32.totalorder %v775, 1
        %vm822 = vcmp.eq.s32.totalorder %v778, 1
        %vm823 = vcmp.eq.s32.totalorder %v781, 1
        %vm824 = vcmp.eq.s32.totalorder %v784, 1
        %vm825 = vcmp.eq.s32.totalorder %v787, 1
        %vm826 = vcmp.eq.s32.totalorder %v790, 1
        %vm827 = vcmp.eq.s32.totalorder %v793, 1
        %vm828 = vcmp.eq.s32.totalorder %v796, 1
        %vm829 = vcmp.eq.s32.totalorder %v799, 1
        %vm830 = vcmp.eq.s32.totalorder %v802, 1
        %vm831 = vcmp.eq.s32.totalorder %v805, 1
        %vm832 = vcmp.eq.s32.totalorder %v808, 1
        %v833 = vsel %vm809, %v689, 0.0
        %v834 = vsel %vm810, %v690, 0.0
        %v835 = vsel %vm811, %v691, 0.0
        %v836 = vsel %vm812, %v692, 0.0
        %v837 = vsel %vm813, %v693, 0.0
        %v838 = vsel %vm814, %v694, 0.0
        %v839 = vsel %vm815, %v695, 0.0
        %v840 = vsel %vm816, %v696, 0.0
        %v841 = vsel %vm817, %v697, 0.0
        %v842 = vsel %vm818, %v698, 0.0
        %v843 = vsel %vm819, %v699, 0.0
        %v844 = vsel %vm820, %v700, 0.0
        %v845 = vsel %vm821, %v701, 0.0
        %v846 = vsel %vm822, %v702, 0.0
        %v847 = vsel %vm823, %v703, 0.0
        %v848 = vsel %vm824, %v704, 0.0
        %v849 = vsel %vm825, %v705, 0.0
        %v850 = vsel %vm826, %v706, 0.0
        %v851 = vsel %vm827, %v707, 0.0
        %v852 = vsel %vm828, %v708, 0.0
        %v853 = vsel %vm829, %v709, 0.0
        %v854 = vsel %vm830, %v710, 0.0
        %v855 = vsel %vm831, %v711, 0.0
        %v856 = vsel %vm832, %v712, 0.0
        %v857 = vld [vmem:[#allocation2] sm:$0xff]
        %vm858 = vcmask 261120
        %v859 = vsel %vm858, %v833, 0.0
        %v860 = vsel %vm858, %v834, 0.0
        %v861 = vadd.f32 %v859, %v860
        %v862 = vsel %vm858, %v835, 0.0
        %v863 = vadd.f32 %v861, %v862
        %v864 = vrot.slane %v863, 4
        %v865 = vadd.f32 %v863, %v864
        %v866 = vrot.slane %v865, 2
        %v867 = vadd.f32 %v865, %v866
        %v868 = vrot.slane %v867, 1
        %v869 = vadd.f32 %v867, %v868
        %v870 = vsel %vm858, %v836, 0.0
        %v871 = vsel %vm858, %v837, 0.0
        %v872 = vadd.f32 %v870, %v871
        %v873 = vsel %vm858, %v838, 0.0
        %v874 = vadd.f32 %v872, %v873
        %v875 = vrot.slane %v874, 4
        %v876 = vadd.f32 %v874, %v875
        %v877 = vrot.slane %v876, 2
        %v878 = vadd.f32 %v876, %v877
        %v879 = vrot.slane %v878, 1
        %v880 = vadd.f32 %v878, %v879
        %v881 = vsel %vm858, %v839, 0.0
        %v882 = vsel %vm858, %v840, 0.0
        %v883 = vadd.f32 %v881, %v882
        %v884 = vsel %vm858, %v841, 0.0
        %v885 = vadd.f32 %v883, %v884
        %v886 = vrot.slane %v885, 4
        %v887 = vadd.f32 %v885, %v886
        %v888 = vrot.slane %v887, 2
        %v889 = vadd.f32 %v887, %v888
        %v890 = vrot.slane %v889, 1
        %v891 = vadd.f32 %v889, %v890
        %v892 = vsel %vm858, %v842, 0.0
        %v893 = vsel %vm858, %v843, 0.0
        %v894 = vadd.f32 %v892, %v893
        %v895 = vsel %vm858, %v844, 0.0
        %v896 = vadd.f32 %v894, %v895
        %v897 = vrot.slane %v896, 4
        %v898 = vadd.f32 %v896, %v897
        %v899 = vrot.slane %v898, 2
        %v900 = vadd.f32 %v898, %v899
        %v901 = vrot.slane %v900, 1
        %v902 = vadd.f32 %v900, %v901
        %v903 = vsel %vm858, %v845, 0.0
        %v904 = vsel %vm858, %v846, 0.0
        %v905 = vadd.f32 %v903, %v904
        %v906 = vsel %vm858, %v847, 0.0
        %v907 = vadd.f32 %v905, %v906
        %v908 = vrot.slane %v907, 4
        %v909 = vadd.f32 %v907, %v908
        %v910 = vrot.slane %v909, 2
        %v911 = vadd.f32 %v909, %v910
        %v912 = vrot.slane %v911, 1
        %v913 = vadd.f32 %v911, %v912
        %v914 = vsel %vm858, %v848, 0.0
        %v915 = vsel %vm858, %v849, 0.0
        %v916 = vadd.f32 %v914, %v915
        %v917 = vsel %vm858, %v850, 0.0
        %v918 = vadd.f32 %v916, %v917
        %v919 = vrot.slane %v918, 4
        %v920 = vadd.f32 %v918, %v919
        %v921 = vrot.slane %v920, 2
        %v922 = vadd.f32 %v920, %v921
        %v923 = vrot.slane %v922, 1
        %v924 = vadd.f32 %v922, %v923
        %v925 = vsel %vm858, %v851, 0.0
        %v926 = vsel %vm858, %v852, 0.0
        %v927 = vadd.f32 %v925, %v926
        %v928 = vsel %vm858, %v853, 0.0
        %v929 = vadd.f32 %v927, %v928
        %v930 = vrot.slane %v929, 4
        %v931 = vadd.f32 %v929, %v930
        %v932 = vrot.slane %v931, 2
        %v933 = vadd.f32 %v931, %v932
        %v934 = vrot.slane %v933, 1
        %v935 = vadd.f32 %v933, %v934
        %v936 = vsel %vm858, %v854, 0.0
        %v937 = vsel %vm858, %v855, 0.0
        %v938 = vadd.f32 %v936, %v937
        %v939 = vsel %vm858, %v856, 0.0
        %v940 = vadd.f32 %v938, %v939
        %v941 = vrot.slane %v940, 4
        %v942 = vadd.f32 %v940, %v941
        %v943 = vrot.slane %v942, 2
        %v944 = vadd.f32 %v942, %v943
        %v945 = vrot.slane %v944, 1
        %v946 = vadd.f32 %v944, %v945
        %vm955 = vcmask 1041409
        %v956 = vsel %vm955, %v880, %v869
        %vm957 = vcmask 1042434
        %v958 = vsel %vm957, %v891, %v956
        %vm959 = vcmask 1043459
        %v960 = vsel %vm959, %v902, %v958
        %vm961 = vcmask 1044484
        %v962 = vsel %vm961, %v913, %v960
        %vm963 = vcmask 1045509
        %v964 = vsel %vm963, %v924, %v962
        %vm965 = vcmask 1046534
        %v966 = vsel %vm965, %v935, %v964
        %vm967 = vcmask 1047559
        %v968 = vsel %vm967, %v946, %v966
        %v970 = vadd.f32 %v857, %v968
        %971 = vst.msk [vmem:[#allocation2] sm:$0xff] %vm858, %v970
        %p972 = scmp.eq.s32.totalorder %s23, 2
        // Predicated region
        $region103: #{tpu_custom_call.1} parent=93 // pred_check
          %p973 = pneg %p972
        $region104: #{tpu_custom_call.1} parent=93 // pred_check_branch
          %975 = sbr.rel (%p973) target = $region106
        $region105: #{tpu_custom_call.1} parent=93 // pred_region
          %v976 = vld [vmem:[%s502] sm:$0xff]
          %v977 = vcvt.s32.f32 %v976
          %v978 = vsub.f32 %v977, 2.0
          %v979 = vmax.f32 %v978, 1.0
          %v980 = vld [vmem:[#allocation2] sm:$0xff]
          %982 = vset.pattern.permute.xlu0 0
          %983 = vperm.xlu0 %982, %v979
          %v984 = vpop.permute.xlu0 %983
          %v986 = vrcp.pop %v984
          %v987 = vmul.f32 %v980, %v986
          %v988 = vld [vmem:[%s2] sm:$0xff]
          %v989 = vld [vmem:[%s2 + $0x8] sm:$0xff]
          %v990 = vld [vmem:[%s2 + $0x10] sm:$0xff]
          %v991 = vld [vmem:[%s2 + $0x18] sm:$0xff]
          %v992 = vld [vmem:[%s3] sm:$0x1]
          %v994 = vlaneseq
          %v995 = vshrl.u32 %v994, 7
          %v996 = vsub.s32 0, %v995
          %v997 = vrot.slane %v992, %v996
          %v1000 = vsel %vm858, %v987, 0
          %1002 = vmatprep.subr.mxu0 0.0
          %1003 = vmatpush1.msra.mxu0 0.0
          %1004 = vmatprep.subr.mxu0 0.0
          %1005 = vmatpush1.msra.mxu0 0.0
          %1006 = vmatprep.subr.mxu0 0.0
          %1007 = vmatpush1.msra.mxu0 0.0
          %1008 = vmatprep.subr.mxu0 0.0
          %1009 = vmatpush1.msra.mxu0 0.0
          %1010 = vmatprep.subr.mxu0 0.0
          %1011 = vmatpush1.msra.mxu0 0.0
          %1012 = vmatprep.subr.mxu0 0.0
          %1013 = vmatpush1.msra.mxu0 0.0
          %1014 = vmatprep.subr.mxu0 0.0
          %1015 = vmatpush1.msra.mxu0 0.0
          %1016 = vmatprep.subr.mxu0 0.0
          %1017 = vmatpush1.msra.mxu0 0.0
          %1018 = vmatprep.subr.mxu0 0.0
          %1019 = vmatpush1.msra.mxu0 0.0
          %1020 = vmatprep.subr.mxu0 0.0
          %1021 = vmatpush1.msra.mxu0 0.0
          %1022 = vmatprep.subr.mxu0 0.0
          %1023 = vmatpush1.msra.mxu0 0.0
          %1024 = vmatprep.subr.mxu0 0.0
          %1025 = vmatpush1.msra.mxu0 0.0
          %1026 = vmatprep.subr.mxu0 0.0
          %1027 = vmatpush1.msra.mxu0 %v991
          %1028 = vmatprep.subr.mxu0 0.0
          %1029 = vmatpush1.msra.mxu0 %v990
          %1030 = vmatprep.subr.mxu0 0.0
          %1031 = vmatpush1.msra.mxu0 %v989
          %1032 = vmatprep.subr.mxu0 0.0
          %1033 = vmatpush1.msra.mxu0 %v988
          %1034 = vmatprep.subr.mxu0 0.0
          %1035 = vmatpush2.msra.mxu0 0.0
          %1036 = vmatprep.subr.mxu0 0.0
          %1037 = vmatpush2.msra.mxu0 0.0
          %1038 = vmatprep.subr.mxu0 0.0
          %1039 = vmatpush2.msra.mxu0 0.0
          %1040 = vmatprep.subr.mxu0 0.0
          %1041 = vmatpush2.msra.mxu0 0.0
          %1042 = vmatprep.subr.mxu0 0.0
          %1043 = vmatpush2.msra.mxu0 0.0
          %1044 = vmatprep.subr.mxu0 0.0
          %1045 = vmatpush2.msra.mxu0 0.0
          %1046 = vmatprep.subr.mxu0 0.0
          %1047 = vmatpush2.msra.mxu0 0.0
          %1048 = vmatprep.subr.mxu0 0.0
          %1049 = vmatpush2.msra.mxu0 0.0
          %1050 = vmatprep.subr.mxu0 0.0
          %1051 = vmatpush2.msra.mxu0 0.0
          %1052 = vmatprep.subr.mxu0 0.0
          %1053 = vmatpush2.msra.mxu0 0.0
          %1054 = vmatprep.subr.mxu0 0.0
          %1055 = vmatpush2.msra.mxu0 0.0
          %1056 = vmatprep.subr.mxu0 0.0
          %1057 = vmatpush2.msra.mxu0 0.0
          %1058 = vmatprep.subr.mxu0 0.0
          %1059 = vmatpush2.msra.mxu0 0.0
          %1060 = vmatprep.subr.mxu0 0.0
          %1061 = vmatpush2.msra.mxu0 0.0
          %1062 = vmatprep.subr.mxu0 0.0
          %1063 = vmatpush2.msra.mxu0 0.0
          %1064 = vmatprep.subr.mxu0 0.0
          %1065 = vmatpush2.msra.mxu0 0.0
          %1066 = vmatprep.mubr.f32.mxu0 0.0
          %1067 = vmatmul.mubr.f32.gmra.mxu0 %v1000
          %v1068 = vpop.f32.mrf.mxu0
          %v1069 = vadd.f32 %v997, %v1068
          %v1070 = vpop.f32.mrf.mxu0
          %1071 = vdwg.mxu0
          %1072 = vst [vmem:[%s498] sm:$0xff] %v1069
        $region106: #{tpu_custom_call.1} parent=93 // pred_fallthru
          _
        %s1073 = sand.u32 %s134, 1
        %s1074 = scalar_lea.sflag [#allocation5], %s1073
        %s1075 = sand.u32 %s134, 1
        %s1076 = smul.addr %s1075, 8
        %s1077 = scalar_lea.vmem [#allocation4], %s1076
        // Predicated region
        $region107: #{tpu_custom_call.1} parent=93 // pred_check
          %p1078 = pneg %p144
        $region108: #{tpu_custom_call.1} parent=93 // pred_check_branch
          %1080 = sbr.rel (%p1078) target = $region110
        $region109: #{tpu_custom_call.1} parent=93 // pred_region
          %s1082 = ssub.s32 128, 128
          %1083 = vsyncadd %s1074, %s1082
          %s1084 = smul.addr %s22, 128
          %s1085 = scalar_lea.hbm %s4, %s1084
          %s1087 = sshll.u32 %s1077, 4
          %s1088 = int_to_ptr.vmem [resolvable:$true] %s1087
          %1090 = dma.vmem_to_hbm [thread:$0]  %s1088, 128, %s1085, %s1074
        $region110: #{tpu_custom_call.1} parent=93 // pred_fallthru
          _
      $region94: #{tpu_custom_call.1} parent=5 // pred_fallthru
        _
      %p1091 = scmp.le.s32.totalorder 2, %s13
      // Predicated region
      $region111: #{tpu_custom_call.1} parent=5 // pred_check
        %p1092 = pneg %p1091
      $region112: #{tpu_custom_call.1} parent=5 // pred_check_branch
        %1094 = sbr.rel (%p1092) target = $region114
      $region113: #{tpu_custom_call.1} parent=5 // pred_region
        %s1095 = ssub.s32 %s13, 2
        // Predicated region
        $region115: #{tpu_custom_call.1} parent=113 // pred_check
          %p1096 = pneg %p150
        $region116: #{tpu_custom_call.1} parent=113 // pred_check_branch
          %1098 = sbr.rel (%p1096) target = $region118
        $region117: #{tpu_custom_call.1} parent=113 // pred_region
          %s1099 = sand.u32 %s135, 1
          %s1100 = scalar_lea.sflag [#allocation5], %s1099
          %s1101 = sand.u32 %s135, 1
          %s1102 = smul.addr %s1101, 8
          %s1103 = scalar_lea.vmem [#allocation4], %s1102
          %1104 = dma.done %s1100, 128
        $region118: #{tpu_custom_call.1} parent=113 // pred_fallthru
          _
      $region114: #{tpu_custom_call.1} parent=5 // pred_fallthru
        _
    $region6: #{tpu_custom_call.1} parent=1 // loop_footer
      %s17 = sadd.s32 1, %s13
    $region7: #{tpu_custom_call.1} parent=1 // loop_footer_branch
      %12 = sbr.rel target = $region3
    $region8: #{tpu_custom_call.1} parent=1 // loop_exit
      _
    %1105 = vsyncpa [#allocation5], 1
    %s1106 = scalar_lea.sflag [#allocation5], 1
    %1107 = vsyncpa %s1106, 1

</llo_original>
